<compile_context>
chip_gen: v7x
topology: tpu7x:2x2x1
jax: 0.10.0
libtpu: 0.0.40
codegen_flags: <defaults>
</compile_context>

<pallas_src>
import jax
import jax.numpy as jnp
from jax.experimental import pallas as pl
from jax.experimental.pallas import tpu as pltpu

# Logical sizes of the PyTorch module: Linear(4,10) -> Linear(10,10) -> Linear(10,1)
D_IN, HID, D_OUT = 4, 10, 1
# Hidden dim zero-padded to a sublane-friendly size inside the kernel.
HID_P = 16


def _mlp_kernel(w1_ref, b1_ref, w2_ref, b2_ref, w3_ref, b3_ref, x_ref, o_ref):
    # x: (4, TB) -- batch on the 128-lane axis, no feature padding.
    x = x_ref[...]

    # Layer 1: Linear(4,10) + ReLU.  Padded hidden rows are exactly zero
    # (zero weights + zero bias -> stay zero through ReLU).
    h1 = jnp.dot(w1_ref[...], x, preferred_element_type=jnp.float32) + b1_ref[...]
    h1 = jnp.maximum(h1, 0.0)                                   # (16, TB)

    # Layer 2: Linear(10,10) + ReLU.
    h2 = jnp.dot(w2_ref[...], h1, preferred_element_type=jnp.float32) + b2_ref[...]
    h2 = jnp.maximum(h2, 0.0)                                   # (16, TB)

    # Layer 3: Linear(10,1) + Sigmoid (exp on EUP, exact reciprocal -> 1e-5 parity).
    z = jnp.dot(w3_ref[...], h2, preferred_element_type=jnp.float32) + b3_ref[0, 0]
    o_ref[...] = pl.reciprocal(1.0 + jnp.exp(-z)).astype(o_ref.dtype)   # (1, TB)


def pad_params(params):
    """Zero-pad PyTorch-style params (w: (out,in), b: (out,)) to kernel shapes."""
    w1 = jnp.zeros((HID_P, D_IN), jnp.float32).at[:HID, :].set(
        params["w1"].astype(jnp.float32))
    b1 = jnp.zeros((HID_P, 1), jnp.float32).at[:HID, 0].set(
        params["b1"].reshape(HID).astype(jnp.float32))
    w2 = jnp.zeros((HID_P, HID_P), jnp.float32).at[:HID, :HID].set(
        params["w2"].astype(jnp.float32))
    b2 = jnp.zeros((HID_P, 1), jnp.float32).at[:HID, 0].set(
        params["b2"].reshape(HID).astype(jnp.float32))
    w3 = jnp.zeros((1, HID_P), jnp.float32).at[:, :HID].set(
        params["w3"].reshape(1, HID).astype(jnp.float32))
    b3 = params["b3"].reshape(1, 1).astype(jnp.float32)
    return {"w1": w1, "b1": b1, "w2": w2, "b2": b2, "w3": w3, "b3": b3}


def model2nn_forward(x, padded, *, tb=32768, x_dtype=jnp.float32):
    """x: (B, 4); padded: dict from pad_params(); returns (B, 1) float32."""
    assert tb % 128 == 0
    assert x.shape[1] == D_IN
    B = x.shape[0]
    # Lane-aligned batch tile: up to `tb`, but never over-pad small batches.
    TB = min(int(tb), 128 * pl.cdiv(B, 128))
    B_pad = TB * pl.cdiv(B, TB)

    # Batch onto the lane axis; no feature padding (4 sublanes only). With
    # allow_input_fusion set, XLA may fuse this transpose/pad into the kernel's
    # input instead of materializing xt in HBM.
    xt = jnp.pad(x.astype(jnp.float32).T, ((0, 0), (0, B_pad - B))).astype(x_dtype)
    w1 = padded["w1"].astype(x_dtype)  # match first-GEMM operand dtype

    out = pl.pallas_call(
        _mlp_kernel,
        out_shape=jax.ShapeDtypeStruct((1, B_pad), jnp.float32),
        grid=(B_pad // TB,),
        in_specs=[
            pl.BlockSpec((HID_P, D_IN), lambda i: (0, 0)),        # W1, resident
            pl.BlockSpec((HID_P, 1), lambda i: (0, 0)),           # b1, resident
            pl.BlockSpec((HID_P, HID_P), lambda i: (0, 0)),       # W2, resident
            pl.BlockSpec((HID_P, 1), lambda i: (0, 0)),           # b2, resident
            pl.BlockSpec((1, HID_P), lambda i: (0, 0)),           # W3, resident
            pl.BlockSpec(memory_space=pltpu.MemorySpace.SMEM),    # b3 scalar in SMEM
            pl.BlockSpec((D_IN, TB), lambda i: (0, i)),           # x tile (batch on lanes)
        ],
        out_specs=pl.BlockSpec((1, TB), lambda i: (0, i)),         # lane-dense output row
        compiler_params=pltpu.CompilerParams(
            dimension_semantics=("parallel",),
            vmem_limit_bytes=32 * 1024 * 1024,
            allow_input_fusion=[False, False, False, False, False, False, True],
        ),
    )(w1, padded["b1"], padded["w2"], padded["b2"], padded["w3"], padded["b3"], xt)

    return out[0, 0:B].reshape(B, 1)


def init_params(key):
    """PyTorch nn.Linear default init: U[-1/sqrt(fan_in), +1/sqrt(fan_in)].
    Weights stored PyTorch-style (out_features, in_features), biases (out_features,)."""
    def linear(key, fan_in, fan_out):
        kw, kb = jax.random.split(key)
        bound = 1.0 / jnp.sqrt(fan_in)
        w = jax.random.uniform(kw, (fan_out, fan_in), jnp.float32, -bound, bound)
        b = jax.random.uniform(kb, (fan_out,), jnp.float32, -bound, bound)
        return w, b

    k1, k2, k3 = jax.random.split(key, 3)
    w1, b1 = linear(k1, 4, 10)
    w2, b2 = linear(k2, 10, 10)
    w3, b3 = linear(k3, 10, 1)
    return {"w1": w1, "b1": b1, "w2": w2, "b2": b2, "w3": w3, "b3": b3}


def reference_forward(x, p):
    h = jnp.maximum(x @ p["w1"].T + p["b1"], 0.0)
    h = jnp.maximum(h @ p["w2"].T + p["b2"], 0.0)
    h = h @ p["w3"].T + p["b3"]
    return jax.nn.sigmoid(h)


if __name__ == "__main__":
    key = jax.random.PRNGKey(0)
    kx, kp = jax.random.split(key)

    params = init_params(kp)
    padded = pad_params(params)

    # 1) Small batch (single grid step, default large tile clamped by min()).
    x_small = jax.random.normal(jax.random.fold_in(kx, 0), (8, D_IN), dtype=jnp.float32)
    out = jax.block_until_ready(model2nn_forward(x_small, padded))
    ref = reference_forward(x_small, params)
    assert out.shape == (8, 1), out.shape
    assert jnp.allclose(out, ref, atol=1e-5, rtol=1e-5), float(jnp.max(jnp.abs(out - ref)))

    # 2) Non-multiple-of-128 batch with a small tile to exercise the multi-step
    #    parallel grid (padding + pipelining path).
    x_med = jax.random.normal(jax.random.fold_in(kx, 1), (1000, D_IN), dtype=jnp.float32)
    out = jax.block_until_ready(model2nn_forward(x_med, padded, tb=256))
    ref = reference_forward(x_med, params)
    assert out.shape == (1000, 1), out.shape
    assert jnp.allclose(out, ref, atol=1e-5, rtol=1e-5), float(jnp.max(jnp.abs(out - ref)))

    # 3) Opt-in bf16 input path (halves the dominant x HBM read); looser tolerance.
    out_bf = jax.block_until_ready(
        model2nn_forward(x_med, padded, tb=256, x_dtype=jnp.bfloat16))
    assert out_bf.shape == (1000, 1), out_bf.shape
    assert jnp.allclose(out_bf, ref, atol=1e-2, rtol=0.0), float(jnp.max(jnp.abs(out_bf - ref)))

    print("KERNEL_OK")
</pallas_src>

<mosaic_0001>
module attributes {stable_mosaic.version = 11 : i64} {
  func.func @_mlp_kernel(%arg0: i32, %arg1: memref<16x4xf32, #tpu.memory_space<vmem>>, %arg2: memref<16x1xf32, #tpu.memory_space<vmem>>, %arg3: memref<16x16xf32, #tpu.memory_space<vmem>>, %arg4: memref<16x1xf32, #tpu.memory_space<vmem>>, %arg5: memref<1x16xf32, #tpu.memory_space<vmem>>, %arg6: memref<1x1xf32, #tpu.memory_space<smem>>, %arg7: memref<4x128xf32, #tpu.memory_space<vmem>>, %arg8: memref<1x128xf32, #tpu.memory_space<vmem>>) attributes {dimension_semantics = [#tpu.dimension_semantics<parallel>], iteration_bounds = array<i64: 1>, scalar_prefetch = 0 : i64, scratch_operands = 0 : i64, tpu.core_type = #tpu.core_type<tc>, window_params = [{pipeline_mode = #tpu.pipeline_mode<synchronous>, transform_indices = @transform_0, window_bounds = array<i64: 16, 4>}, {pipeline_mode = #tpu.pipeline_mode<synchronous>, transform_indices = @transform_1, window_bounds = array<i64: 16, 1>}, {pipeline_mode = #tpu.pipeline_mode<synchronous>, transform_indices = @transform_2, window_bounds = array<i64: 16, 16>}, {pipeline_mode = #tpu.pipeline_mode<synchronous>, transform_indices = @transform_3, window_bounds = array<i64: 16, 1>}, {pipeline_mode = #tpu.pipeline_mode<synchronous>, transform_indices = @transform_4, window_bounds = array<i64: 1, 16>}, {transform_indices = @transform_5, window_bounds = array<i64: 1, 1>}, {transform_indices = @transform_6, window_bounds = array<i64: 4, 128>}, {transform_indices = @transform_7, window_bounds = array<i64: 1, 128>}]} {
    %c0 = arith.constant 0 : index
    %c0_0 = arith.constant 0 : index
    %0 = vector.load %arg7[%c0, %c0_0] : memref<4x128xf32, #tpu.memory_space<vmem>>, vector<4x128xf32>
    %c0_1 = arith.constant 0 : index
    %c0_2 = arith.constant 0 : index
    %1 = vector.load %arg1[%c0_1, %c0_2] : memref<16x4xf32, #tpu.memory_space<vmem>>, vector<16x4xf32>
    %cst = arith.constant dense<0.000000e+00> : vector<16x128xf32>
    %2 = tpu.matmul %1, %0, %cst {dimension_numbers = #tpu.dot_dimension_numbers<[1], [0], [0], [1], [0, 0, 1, 1], [], []>} : vector<16x4xf32>, vector<4x128xf32>, vector<16x128xf32> -> vector<16x128xf32>
    %c0_3 = arith.constant 0 : index
    %c0_4 = arith.constant 0 : index
    %3 = vector.load %arg2[%c0_3, %c0_4] : memref<16x1xf32, #tpu.memory_space<vmem>>, vector<16x1xf32>
    %4 = vector.broadcast %3 : vector<16x1xf32> to vector<16x128xf32>
    %5 = arith.addf %2, %4 : vector<16x128xf32>
    %cst_5 = arith.constant 0.000000e+00 : f32
    %6 = vector.broadcast %cst_5 : f32 to vector<16x128xf32>
    %7 = arith.maximumf %5, %6 : vector<16x128xf32>
    %c0_6 = arith.constant 0 : index
    %c0_7 = arith.constant 0 : index
    %8 = vector.load %arg3[%c0_6, %c0_7] : memref<16x16xf32, #tpu.memory_space<vmem>>, vector<16x16xf32>
    %cst_8 = arith.constant dense<0.000000e+00> : vector<16x128xf32>
    %9 = tpu.matmul %8, %7, %cst_8 {dimension_numbers = #tpu.dot_dimension_numbers<[1], [0], [0], [1], [0, 0, 1, 1], [], []>} : vector<16x16xf32>, vector<16x128xf32>, vector<16x128xf32> -> vector<16x128xf32>
    %c0_9 = arith.constant 0 : index
    %c0_10 = arith.constant 0 : index
    %10 = vector.load %arg4[%c0_9, %c0_10] : memref<16x1xf32, #tpu.memory_space<vmem>>, vector<16x1xf32>
    %11 = vector.broadcast %10 : vector<16x1xf32> to vector<16x128xf32>
    %12 = arith.addf %9, %11 : vector<16x128xf32>
    %cst_11 = arith.constant 0.000000e+00 : f32
    %13 = vector.broadcast %cst_11 : f32 to vector<16x128xf32>
    %14 = arith.maximumf %12, %13 : vector<16x128xf32>
    %c0_12 = arith.constant 0 : index
    %c0_13 = arith.constant 0 : index
    %15 = vector.load %arg5[%c0_12, %c0_13] : memref<1x16xf32, #tpu.memory_space<vmem>>, vector<1x16xf32>
    %cst_14 = arith.constant dense<0.000000e+00> : vector<1x128xf32>
    %16 = tpu.matmul %15, %14, %cst_14 {dimension_numbers = #tpu.dot_dimension_numbers<[1], [0], [0], [1], [0, 0, 1, 1], [], []>} : vector<1x16xf32>, vector<16x128xf32>, vector<1x128xf32> -> vector<1x128xf32>
    %c0_15 = arith.constant 0 : index
    %c0_16 = arith.constant 0 : index
    %17 = memref.load %arg6[%c0_15, %c0_16] : memref<1x1xf32, #tpu.memory_space<smem>>
    %18 = vector.broadcast %17 : f32 to vector<1x128xf32>
    %19 = arith.addf %16, %18 : vector<1x128xf32>
    %cst_17 = arith.constant 0.000000e+00 : f32
    %20 = vector.broadcast %cst_17 : f32 to vector<1x128xf32>
    %21 = arith.subf %20, %19 : vector<1x128xf32>
    %22 = math.exp %21 : vector<1x128xf32>
    %cst_18 = arith.constant 1.000000e+00 : f32
    %23 = vector.broadcast %cst_18 : f32 to vector<1x128xf32>
    %24 = arith.addf %23, %22 : vector<1x128xf32>
    %25 = tpu.reciprocal %24 : vector<1x128xf32> -> vector<1x128xf32>
    %c0_19 = arith.constant 0 : index
    %c0_20 = arith.constant 0 : index
    %26 = vector.load %arg8[%c0_19, %c0_20] : memref<1x128xf32, #tpu.memory_space<vmem>>, vector<1x128xf32>
    tpu.vector_store %arg8[%c0_19, %c0_20], %25 {strides = array<i32>} : memref<1x128xf32, #tpu.memory_space<vmem>>, vector<1x128xf32>,
    return
  }
  func.func @transform_0(%arg0: i32) -> (i32, i32) {
    %c0_i32 = arith.constant 0 : i32
    %c0_i32_0 = arith.constant 0 : i32
    %c0_i32_1 = arith.constant 0 : i32
    return %c0_i32, %c0_i32_0 : i32, i32
  }
  func.func @transform_1(%arg0: i32) -> (i32, i32) {
    %c0_i32 = arith.constant 0 : i32
    %c0_i32_0 = arith.constant 0 : i32
    %c0_i32_1 = arith.constant 0 : i32
    return %c0_i32, %c0_i32_0 : i32, i32
  }
  func.func @transform_2(%arg0: i32) -> (i32, i32) {
    %c0_i32 = arith.constant 0 : i32
    %c0_i32_0 = arith.constant 0 : i32
    %c0_i32_1 = arith.constant 0 : i32
    return %c0_i32, %c0_i32_0 : i32, i32
  }
  func.func @transform_3(%arg0: i32) -> (i32, i32) {
    %c0_i32 = arith.constant 0 : i32
    %c0_i32_0 = arith.constant 0 : i32
    %c0_i32_1 = arith.constant 0 : i32
    return %c0_i32, %c0_i32_0 : i32, i32
  }
  func.func @transform_4(%arg0: i32) -> (i32, i32) {
    %c0_i32 = arith.constant 0 : i32
    %c0_i32_0 = arith.constant 0 : i32
    %c0_i32_1 = arith.constant 0 : i32
    return %c0_i32, %c0_i32_0 : i32, i32
  }
  func.func @transform_5(%arg0: i32) -> (i32, i32) {
    %c0_i32 = arith.constant 0 : i32
    %c0_i32_0 = arith.constant 0 : i32
    %c0_i32_1 = arith.constant 0 : i32
    return %c0_i32, %c0_i32_0 : i32, i32
  }
  func.func @transform_6(%arg0: i32) -> (i32, i32) {
    %c0_i32 = arith.constant 0 : i32
    %c0_i32_0 = arith.constant 0 : i32
    return %c0_i32, %arg0 : i32, i32
  }
  func.func @transform_7(%arg0: i32) -> (i32, i32) {
    %c0_i32 = arith.constant 0 : i32
    %c0_i32_0 = arith.constant 0 : i32
    return %c0_i32, %arg0 : i32, i32
  }
}

</mosaic_0001>

<llo_original>
// kernel: tpu_custom_call.1
$region0: #{tpu_custom_call.1}
  #allocation0 [shape = 'u32[]', space=smem, size = 0x4, offset = 0x4, fixed_abs, tag = 'smem constant byte address 0x4 - core index']
  #allocation1 [shape = 'u32[144,128]{1,0:T(1,128)}', space=vmem, size = 0x12000, scoped, tag = 'internal scratch']
  #allocation2 [shape = 'f32[1,1]{1,0:T(1,128)S(6)}', space=smem, size = 0x200, scoped, tag = 'scoped memory for tpu_custom_call.1']
  %s0 = inlined_call_operand.vmem [shape: f32[16,4], index: 0, kind: input, shape index: {}]
  %s1 = inlined_call_operand.vmem [shape: f32[16,1], index: 1, kind: input, shape index: {}]
  %s2 = inlined_call_operand.vmem [shape: f32[16,16], index: 2, kind: input, shape index: {}]
  %s3 = inlined_call_operand.vmem [shape: f32[16,1], index: 3, kind: input, shape index: {}]
  %s4 = inlined_call_operand.vmem [shape: f32[1,16], index: 4, kind: input, shape index: {}]
  %s5 = inlined_call_operand.<no memory space> [shape: f32[1,1], index: 5, kind: input, shape index: {}]
  %s6 = inlined_call_operand.vmem [shape: f32[4,128], index: 6, kind: input, shape index: {}]
  %s7 = inlined_call_operand.hbm [shape: f32[1,128], index: 7, kind: output, shape index: {}]
  %s8 = sld [smem:[#allocation0]]
  $region38: #{tpu_custom_call.1} parent=0
    _
  %s10 = ssub.s32 1, %s8
  %s11 = scalar_select 0, %s10, %s8
  %12 = sst [smem:[#allocation2]] %s5
  $region1: #{tpu_custom_call.1} parent=0
    #allocation3 [shape = 'u8[512]{0}', space=vmem, size = 0x400, scoped, tag = 'output window, operand 0, single buffered']
    #allocation4 [shape = 's32[1]{0}', space=sflag, size = 0x4, scoped, tag = 'scoped memory for tpu_custom_call.1']
    %13 = vsyncpa [#allocation4], 0
    // Predicated region
    $region2: #{tpu_custom_call.1} parent=1 // pred_check
      _
    $region3: #{tpu_custom_call.1} parent=1 // pred_check_branch
      %15 = sbr.rel (0) target = $region5
    $region4: #{tpu_custom_call.1} parent=1 // pred_region
      _
    $region5: #{tpu_custom_call.1} parent=1 // pred_fallthru
      _
    // Predicated region
    $region6: #{tpu_custom_call.1} parent=1 // pred_check
      _
    $region7: #{tpu_custom_call.1} parent=1 // pred_check_branch
      %17 = sbr.rel (0) target = $region9
    $region8: #{tpu_custom_call.1} parent=1 // pred_region
      _
    $region9: #{tpu_custom_call.1} parent=1 // pred_fallthru
      _
    // Predicated region
    $region10: #{tpu_custom_call.1} parent=1 // pred_check
      _
    $region11: #{tpu_custom_call.1} parent=1 // pred_check_branch
      %19 = sbr.rel (0) target = $region13
    $region12: #{tpu_custom_call.1} parent=1 // pred_region
      _
    $region13: #{tpu_custom_call.1} parent=1 // pred_fallthru
      _
    // Predicated region
    $region14: #{tpu_custom_call.1} parent=1 // pred_check
      _
    $region15: #{tpu_custom_call.1} parent=1 // pred_check_branch
      %21 = sbr.rel (0) target = $region17
    $region16: #{tpu_custom_call.1} parent=1 // pred_region
      _
    $region17: #{tpu_custom_call.1} parent=1 // pred_fallthru
      _
    // Predicated region
    $region18: #{tpu_custom_call.1} parent=1 // pred_check
      _
    $region19: #{tpu_custom_call.1} parent=1 // pred_check_branch
      %23 = sbr.rel (0) target = $region21
    $region20: #{tpu_custom_call.1} parent=1 // pred_region
      _
    $region21: #{tpu_custom_call.1} parent=1 // pred_fallthru
      _
    // Predicated region
    $region22: #{tpu_custom_call.1} parent=1 // pred_check
      _
    $region23: #{tpu_custom_call.1} parent=1 // pred_check_branch
      %25 = sbr.rel (0) target = $region25
    $region24: #{tpu_custom_call.1} parent=1 // pred_region
      _
    $region25: #{tpu_custom_call.1} parent=1 // pred_fallthru
      _
    // Predicated region
    $region26: #{tpu_custom_call.1} parent=1 // pred_check
      _
    $region27: #{tpu_custom_call.1} parent=1 // pred_check_branch
      %27 = sbr.rel (0) target = $region29
    $region28: #{tpu_custom_call.1} parent=1 // pred_region
      _
    $region29: #{tpu_custom_call.1} parent=1 // pred_fallthru
      _
    %v28 = vld [vmem:[%s6] sm:$0xf]
    %v29 = vld [vmem:[%s0] sm:$0xff]
    %v30 = vld [vmem:[%s0 + $0x8] sm:$0xff]
    %v31 = vld [vmem:[%s1] sm:$0xff]
    %v32 = vld [vmem:[%s1 + $0x8] sm:$0xff]
    %34 = vset.pattern.permute.xlu0 0
    %35 = vperm.xlu0 %34, %v31
    %v36 = vpop.permute.xlu0 %35
    %39 = vset.pattern.permute.xlu0 0
    %40 = vperm.xlu0 %39, %v32
    %v41 = vpop.permute.xlu0 %40
    %vm43 = vcmask 31744
    %v45 = vsel %vm43, %v29, 0
    %v48 = vsel %vm43, %v30, 0
    %vm50 = vcmask 1043456
    %v52 = vsel %vm50, %v28, 0
    %54 = vmatprep.subr.mxu0 0.0
    %55 = vmatpush1.msra.mxu0 %v52
    %56 = vmatprep.subr.mxu0 0.0
    %57 = vmatpush1.msra.mxu0 0.0
    %58 = vmatprep.subr.mxu0 0.0
    %59 = vmatpush1.msra.mxu0 0.0
    %60 = vmatprep.subr.mxu0 0.0
    %61 = vmatpush1.msra.mxu0 0.0
    %62 = vmatprep.subr.mxu0 0.0
    %63 = vmatpush1.msra.mxu0 0.0
    %64 = vmatprep.subr.mxu0 0.0
    %65 = vmatpush1.msra.mxu0 0.0
    %66 = vmatprep.subr.mxu0 0.0
    %67 = vmatpush1.msra.mxu0 0.0
    %68 = vmatprep.subr.mxu0 0.0
    %69 = vmatpush1.msra.mxu0 0.0
    %70 = vmatprep.subr.mxu0 0.0
    %71 = vmatpush1.msra.mxu0 0.0
    %72 = vmatprep.subr.mxu0 0.0
    %73 = vmatpush1.msra.mxu0 0.0
    %74 = vmatprep.subr.mxu0 0.0
    %75 = vmatpush1.msra.mxu0 0.0
    %76 = vmatprep.subr.mxu0 0.0
    %77 = vmatpush1.msra.mxu0 0.0
    %78 = vmatprep.subr.mxu0 0.0
    %79 = vmatpush1.msra.mxu0 0.0
    %80 = vmatprep.subr.mxu0 0.0
    %81 = vmatpush1.msra.mxu0 0.0
    %82 = vmatprep.subr.mxu0 0.0
    %83 = vmatpush1.msra.mxu0 0.0
    %84 = vmatprep.subr.mxu0 0.0
    %85 = vmatpush1.msra.mxu0 0.0
    %86 = vmatprep.subr.mxu0 0.0
    %87 = vmatpush1.msra.mxu0 0.0
    %88 = vmatprep.subr.mxu0 0.0
    %89 = vmatpush1.msra.mxu0 0.0
    %90 = vmatprep.subr.mxu0 0.0
    %91 = vmatpush1.msra.mxu0 0.0
    %92 = vmatprep.subr.mxu0 0.0
    %93 = vmatpush1.msra.mxu0 0.0
    %94 = vmatprep.subr.mxu0 0.0
    %95 = vmatpush1.msra.mxu0 0.0
    %96 = vmatprep.subr.mxu0 0.0
    %97 = vmatpush1.msra.mxu0 0.0
    %98 = vmatprep.subr.mxu0 0.0
    %99 = vmatpush1.msra.mxu0 0.0
    %100 = vmatprep.subr.mxu0 0.0
    %101 = vmatpush1.msra.mxu0 0.0
    %102 = vmatprep.subr.mxu0 0.0
    %103 = vmatpush1.msra.mxu0 0.0
    %104 = vmatprep.subr.mxu0 0.0
    %105 = vmatpush1.msra.mxu0 0.0
    %106 = vmatprep.subr.mxu0 0.0
    %107 = vmatpush1.msra.mxu0 0.0
    %108 = vmatprep.subr.mxu0 0.0
    %109 = vmatpush1.msra.mxu0 0.0
    %110 = vmatprep.subr.mxu0 0.0
    %111 = vmatpush1.msra.mxu0 0.0
    %112 = vmatprep.subr.mxu0 0.0
    %113 = vmatpush1.msra.mxu0 0.0
    %114 = vmatprep.subr.mxu0 0.0
    %115 = vmatpush1.msra.mxu0 0.0
    %116 = vmatprep.subr.mxu0 0.0
    %117 = vmatpush1.msra.mxu0 0.0
    %118 = vmatprep.mubr.f32.mxu0 0.0
    %119 = vmatmul.mubr.f32.gmra.mrb[0].mxu0 %v45
    %v120 = vpop.f32.mrb[0].mxu0
    %v121 = vadd.f32 %v36, %v120
    %v122 = vpop.f32.mrb[0].mxu0
    %123 = vmatprep.mubr.f32.mxu0 0.0
    %124 = vmatmul.mubr.f32.gmra.mrb[0].mxu0 %v48
    %v125 = vpop.f32.mrb[0].mxu0
    %v126 = vadd.f32 %v41, %v125
    %v127 = vpop.f32.mrb[0].mxu0
    %128 = vdwg.mxu0
    %v129 = vmax.f32 %v121, 0.0
    %v130 = vmax.f32 %v126, 0.0
    %v131 = vld [vmem:[%s2] sm:$0xff]
    %v132 = vld [vmem:[%s2 + $0x8] sm:$0xff]
    %v133 = vld [vmem:[%s3] sm:$0xff]
    %v134 = vld [vmem:[%s3 + $0x8] sm:$0xff]
    %136 = vset.pattern.permute.xlu0 0
    %137 = vperm.xlu0 %136, %v133
    %v138 = vpop.permute.xlu0 %137
    %141 = vset.pattern.permute.xlu0 0
    %142 = vperm.xlu0 %141, %v134
    %v143 = vpop.permute.xlu0 %142
    %vm145 = vcmask 130048
    %v147 = vsel %vm145, %v131, 0
    %v150 = vsel %vm145, %v132, 0
    %152 = vmatprep.subr.mxu0 0.0
    %153 = vmatpush1.msra.mxu0 %v129
    %154 = vmatprep.subr.mxu0 0.0
    %155 = vmatpush1.msra.mxu0 %v130
    %156 = vmatprep.subr.mxu0 0.0
    %157 = vmatpush1.msra.mxu0 0.0
    %158 = vmatprep.subr.mxu0 0.0
    %159 = vmatpush1.msra.mxu0 0.0
    %160 = vmatprep.subr.mxu0 0.0
    %161 = vmatpush1.msra.mxu0 0.0
    %162 = vmatprep.subr.mxu0 0.0
    %163 = vmatpush1.msra.mxu0 0.0
    %164 = vmatprep.subr.mxu0 0.0
    %165 = vmatpush1.msra.mxu0 0.0
    %166 = vmatprep.subr.mxu0 0.0
    %167 = vmatpush1.msra.mxu0 0.0
    %168 = vmatprep.subr.mxu0 0.0
    %169 = vmatpush1.msra.mxu0 0.0
    %170 = vmatprep.subr.mxu0 0.0
    %171 = vmatpush1.msra.mxu0 0.0
    %172 = vmatprep.subr.mxu0 0.0
    %173 = vmatpush1.msra.mxu0 0.0
    %174 = vmatprep.subr.mxu0 0.0
    %175 = vmatpush1.msra.mxu0 0.0
    %176 = vmatprep.subr.mxu0 0.0
    %177 = vmatpush1.msra.mxu0 0.0
    %178 = vmatprep.subr.mxu0 0.0
    %179 = vmatpush1.msra.mxu0 0.0
    %180 = vmatprep.subr.mxu0 0.0
    %181 = vmatpush1.msra.mxu0 0.0
    %182 = vmatprep.subr.mxu0 0.0
    %183 = vmatpush1.msra.mxu0 0.0
    %184 = vmatprep.subr.mxu0 0.0
    %185 = vmatpush1.msra.mxu0 0.0
    %186 = vmatprep.subr.mxu0 0.0
    %187 = vmatpush1.msra.mxu0 0.0
    %188 = vmatprep.subr.mxu0 0.0
    %189 = vmatpush1.msra.mxu0 0.0
    %190 = vmatprep.subr.mxu0 0.0
    %191 = vmatpush1.msra.mxu0 0.0
    %192 = vmatprep.subr.mxu0 0.0
    %193 = vmatpush1.msra.mxu0 0.0
    %194 = vmatprep.subr.mxu0 0.0
    %195 = vmatpush1.msra.mxu0 0.0
    %196 = vmatprep.subr.mxu0 0.0
    %197 = vmatpush1.msra.mxu0 0.0
    %198 = vmatprep.subr.mxu0 0.0
    %199 = vmatpush1.msra.mxu0 0.0
    %200 = vmatprep.subr.mxu0 0.0
    %201 = vmatpush1.msra.mxu0 0.0
    %202 = vmatprep.subr.mxu0 0.0
    %203 = vmatpush1.msra.mxu0 0.0
    %204 = vmatprep.subr.mxu0 0.0
    %205 = vmatpush1.msra.mxu0 0.0
    %206 = vmatprep.subr.mxu0 0.0
    %207 = vmatpush1.msra.mxu0 0.0
    %208 = vmatprep.subr.mxu0 0.0
    %209 = vmatpush1.msra.mxu0 0.0
    %210 = vmatprep.subr.mxu0 0.0
    %211 = vmatpush1.msra.mxu0 0.0
    %212 = vmatprep.subr.mxu0 0.0
    %213 = vmatpush1.msra.mxu0 0.0
    %214 = vmatprep.subr.mxu0 0.0
    %215 = vmatpush1.msra.mxu0 0.0
    %216 = vmatprep.mubr.f32.mxu0 0.0
    %217 = vmatmul.mubr.f32.gmra.mrb[0].mxu0 %v147
    %v218 = vpop.f32.mrb[0].mxu0
    %v219 = vadd.f32 %v138, %v218
    %v220 = vpop.f32.mrb[0].mxu0
    %221 = vmatprep.mubr.f32.mxu0 0.0
    %222 = vmatmul.mubr.f32.gmra.mrb[0].mxu0 %v150
    %v223 = vpop.f32.mrb[0].mxu0
    %v224 = vadd.f32 %v143, %v223
    %v225 = vpop.f32.mrb[0].mxu0
    %226 = vdwg.mxu0
    %v227 = vmax.f32 %v219, 0.0
    %v228 = vmax.f32 %v224, 0.0
    %v229 = vld [vmem:[%s4] sm:$0x1]
    %s230 = sld [smem:[#allocation2]]
    %v231 = vstv %s230
    %v233 = vsel %vm145, %v229, 0
    %235 = vmatprep.subr.mxu0 0.0
    %236 = vmatpush1.msra.mxu0 %v227
    %237 = vmatprep.subr.mxu0 0.0
    %238 = vmatpush1.msra.mxu0 %v228
    %239 = vmatprep.subr.mxu0 0.0
    %240 = vmatpush1.msra.mxu0 0.0
    %241 = vmatprep.subr.mxu0 0.0
    %242 = vmatpush1.msra.mxu0 0.0
    %243 = vmatprep.subr.mxu0 0.0
    %244 = vmatpush1.msra.mxu0 0.0
    %245 = vmatprep.subr.mxu0 0.0
    %246 = vmatpush1.msra.mxu0 0.0
    %247 = vmatprep.subr.mxu0 0.0
    %248 = vmatpush1.msra.mxu0 0.0
    %249 = vmatprep.subr.mxu0 0.0
    %250 = vmatpush1.msra.mxu0 0.0
    %251 = vmatprep.subr.mxu0 0.0
    %252 = vmatpush1.msra.mxu0 0.0
    %253 = vmatprep.subr.mxu0 0.0
    %254 = vmatpush1.msra.mxu0 0.0
    %255 = vmatprep.subr.mxu0 0.0
    %256 = vmatpush1.msra.mxu0 0.0
    %257 = vmatprep.subr.mxu0 0.0
    %258 = vmatpush1.msra.mxu0 0.0
    %259 = vmatprep.subr.mxu0 0.0
    %260 = vmatpush1.msra.mxu0 0.0
    %261 = vmatprep.subr.mxu0 0.0
    %262 = vmatpush1.msra.mxu0 0.0
    %263 = vmatprep.subr.mxu0 0.0
    %264 = vmatpush1.msra.mxu0 0.0
    %265 = vmatprep.subr.mxu0 0.0
    %266 = vmatpush1.msra.mxu0 0.0
    %267 = vmatprep.subr.mxu0 0.0
    %268 = vmatpush1.msra.mxu0 0.0
    %269 = vmatprep.subr.mxu0 0.0
    %270 = vmatpush1.msra.mxu0 0.0
    %271 = vmatprep.subr.mxu0 0.0
    %272 = vmatpush1.msra.mxu0 0.0
    %273 = vmatprep.subr.mxu0 0.0
    %274 = vmatpush1.msra.mxu0 0.0
    %275 = vmatprep.subr.mxu0 0.0
    %276 = vmatpush1.msra.mxu0 0.0
    %277 = vmatprep.subr.mxu0 0.0
    %278 = vmatpush1.msra.mxu0 0.0
    %279 = vmatprep.subr.mxu0 0.0
    %280 = vmatpush1.msra.mxu0 0.0
    %281 = vmatprep.subr.mxu0 0.0
    %282 = vmatpush1.msra.mxu0 0.0
    %283 = vmatprep.subr.mxu0 0.0
    %284 = vmatpush1.msra.mxu0 0.0
    %285 = vmatprep.subr.mxu0 0.0
    %286 = vmatpush1.msra.mxu0 0.0
    %287 = vmatprep.subr.mxu0 0.0
    %288 = vmatpush1.msra.mxu0 0.0
    %289 = vmatprep.subr.mxu0 0.0
    %290 = vmatpush1.msra.mxu0 0.0
    %291 = vmatprep.subr.mxu0 0.0
    %292 = vmatpush1.msra.mxu0 0.0
    %293 = vmatprep.subr.mxu0 0.0
    %294 = vmatpush1.msra.mxu0 0.0
    %295 = vmatprep.subr.mxu0 0.0
    %296 = vmatpush1.msra.mxu0 0.0
    %297 = vmatprep.subr.mxu0 0.0
    %298 = vmatpush1.msra.mxu0 0.0
    %299 = vmatprep.mubr.f32.mxu0 0.0
    %300 = vmatmul.mubr.f32.gmra.mrb[0].mxu0 %v233
    %v301 = vpop.f32.mrb[0].mxu0
    %v302 = vadd.f32 %v231, %v301
    %v303 = vpop.f32.mrb[0].mxu0
    %304 = vdwg.mxu0
    %v305 = vsub.f32 0.0, %v302
    %v306 = vmul.f32 %v305, 1.442695
    %v307 = vpow.pop %v306
    %v308 = vadd.f32 %v307, 1.0
    %v309 = vrcp.pop %v308
    %310 = vst [vmem:[#allocation3] sm:$0x1] %v309
    // Predicated region
    $region30: #{tpu_custom_call.1} parent=1 // pred_check
      _
    $region31: #{tpu_custom_call.1} parent=1 // pred_check_branch
      %312 = sbr.rel (0) target = $region33
    $region32: #{tpu_custom_call.1} parent=1 // pred_region
      %s314 = ssub.s32 16, 16
      %315 = vsyncadd [#allocation4], %s314
      %s317 = sshll.u32 [#allocation3], 4
      %s318 = int_to_ptr.vmem [resolvable:$true] %s317
      %320 = dma.vmem_to_hbm [thread:$0]  %s318, 16, %s7, [#allocation4]
    $region33: #{tpu_custom_call.1} parent=1 // pred_fallthru
      _
    // Predicated region
    $region34: #{tpu_custom_call.1} parent=1 // pred_check
      _
    $region35: #{tpu_custom_call.1} parent=1 // pred_check_branch
      %322 = sbr.rel (0) target = $region37
    $region36: #{tpu_custom_call.1} parent=1 // pred_region
      %323 = dma.done [#allocation4], 16
    $region37: #{tpu_custom_call.1} parent=1 // pred_fallthru
      _
    %324 = vsyncpa [#allocation4], 1

</llo_original>
